<compile_context>
chip_gen: v6e
topology: v6e:2x2x1
jax: 0.10.0
libtpu: 0.0.40
codegen_flags: <defaults>
</compile_context>

<pallas_src>
import functools

import jax
import jax.numpy as jnp
from jax.experimental import pallas as pl
from jax.experimental.pallas import tpu as pltpu


def _round_up(x, m):
    return ((x + m - 1) // m) * m


def _se_kernel(x_ref, w1t_ref, b1_ref, w2t_ref, b2_ref, o_ref, *, inv_hw):
    # x_ref: (TB, C, HW) native dtype
    # w1t_ref: (C, Cs)  b1_ref: (1, Cs)
    # w2t_ref: (Cs, C)  b2_ref: (1, C)
    # o_ref: (TB, C, HW)
    x = x_ref[...]                                              # native dtype
    tb, c, hw = x.shape

    # Squeeze: global average pool over HW done on the MXU (contraction with a
    # ones vector, f32 accumulation) instead of a cross-lane XLU reduce.
    ones_hw = jnp.ones((hw, 1), dtype=x.dtype)
    pooled = jnp.dot(x.reshape(tb * c, hw), ones_hw,
                     preferred_element_type=jnp.float32)        # (TB*C, 1) f32
    pooled = pooled.reshape(tb, c) * inv_hw                     # (TB, C)  f32

    # fc1 (1x1 conv == matmul) + ReLU, batched over TB samples, f32 math.
    h = jnp.dot(pooled, w1t_ref[...],
                preferred_element_type=jnp.float32) + b1_ref[...]   # (TB, Cs)
    h = jnp.maximum(h, 0.0)

    # fc2 (1x1 conv == matmul) + Hardsigmoid, f32 math.
    s = jnp.dot(h, w2t_ref[...],
                preferred_element_type=jnp.float32) + b2_ref[...]   # (TB, C)
    s = jnp.clip(s * (1.0 / 6.0) + 0.5, 0.0, 1.0)

    # Excite: per-channel rescale in the native activation dtype.
    scale = s.astype(o_ref.dtype)[:, :, None]                   # (TB, C, 1)
    o_ref[...] = (x * scale).astype(o_ref.dtype)


def _vmem_budget_bytes():
    """Generation-aware cap for the double-buffered VMEM working set."""
    try:
        kind = jax.devices()[0].device_kind.lower()
    except Exception:  # pragma: no cover
        kind = ""
    if "v5" in kind or "v6" in kind:
        return 92 * 1024 * 1024     # 128 MiB physical VMEM (v5e / v6e)
    return 44 * 1024 * 1024         # conservative: v7x has 64 MiB physical


def squeeze_excitation(x, w1, b1, w2, b2, *,
                       target_tile_bytes=8 * 1024 * 1024,
                       donate_x=False):
    """x: (N, C, H, W) NCHW.  w1: (Cs, C), b1: (Cs,), w2: (C, Cs), b2: (C,)."""
    N, C, H, W = x.shape
    Cs = w1.shape[0]
    HW = H * W
    itemsize = jnp.dtype(x.dtype).itemsize

    # Nominal (HBM) and padded (VMEM, lane/sublane-rounded) per-sample bytes.
    per_sample = C * HW * itemsize
    sublane = 8 * max(1, 4 // itemsize)          # f32->8, bf16->16, int8->32
    per_sample_vmem = _round_up(C, sublane) * _round_up(HW, 128) * itemsize

    # --- choose samples-per-block (TB) -------------------------------------
    budget = _vmem_budget_bytes()
    # 2x input + 2x output double buffers + ~1 tile of slack for temporaries.
    tb_vmem = max(1, (budget - (4 << 20)) // (5 * per_sample_vmem))
    tb_tgt = max(1, target_tile_bytes // max(per_sample, 1))
    tb = max(1, min(N, tb_tgt, tb_vmem))

    # Keep >= 4 grid steps (>= 2 per TensorCore on v7x) when tiles stay >= 1 MiB
    # so the per-core software pipeline can still overlap DMA with compute.
    desired_steps = 4
    if N > 1 and pl.cdiv(N, tb) < desired_steps:
        tb_alt = max(1, pl.cdiv(N, desired_steps))
        if tb_alt * per_sample >= (1 << 20):
            tb = tb_alt

    grid_n = pl.cdiv(N, tb)                      # ragged last block: no pad

    x_flat = x.reshape(N, C, HW)

    # Transposed weights so the FCs are (TB, C) @ (C, Cs) and (TB, Cs) @ (Cs, C).
    w1_t = w1.T                      # (C, Cs)
    w2_t = w2.T                      # (Cs, C)
    b1_2d = b1.reshape(1, Cs)
    b2_2d = b2.reshape(1, C)

    kernel = functools.partial(_se_kernel, inv_hw=1.0 / HW)

    weight_bytes = int(
        w1.size * jnp.dtype(w1.dtype).itemsize
        + w2.size * jnp.dtype(w2.dtype).itemsize
        + b1.size * jnp.dtype(b1.dtype).itemsize
        + b2.size * jnp.dtype(b2.dtype).itemsize)
    cost = pl.CostEstimate(
        flops=int(3 * N * C * HW + 4 * N * C * Cs),
        transcendentals=0,
        bytes_accessed=int(2 * N * C * HW * itemsize + weight_bytes),
    )

    needed_vmem = 5 * tb * per_sample_vmem + (2 << 20)
    vmem_limit = int(min(max(needed_vmem, 32 * 1024 * 1024), 100 * 1024 * 1024))

    out_flat = pl.pallas_call(
        kernel,
        out_shape=jax.ShapeDtypeStruct((N, C, HW), x.dtype),
        grid_spec=pltpu.PrefetchScalarGridSpec(
            num_scalar_prefetch=0,
            grid=(grid_n,),
            in_specs=[
                pl.BlockSpec((tb, C, HW), lambda n: (n, 0, 0)),   # x (TB samples)
                pl.BlockSpec((C, Cs), lambda n: (0, 0)),          # w1.T
                pl.BlockSpec((1, Cs), lambda n: (0, 0)),          # b1
                pl.BlockSpec((Cs, C), lambda n: (0, 0)),          # w2.T
                pl.BlockSpec((1, C), lambda n: (0, 0)),           # b2
            ],
            out_specs=pl.BlockSpec((tb, C, HW), lambda n: (n, 0, 0)),
        ),
        compiler_params=pltpu.CompilerParams(
            dimension_semantics=("parallel",),
            vmem_limit_bytes=vmem_limit,
        ),
        cost_estimate=cost,
        input_output_aliases=({0: 0} if donate_x else {}),
    )(x_flat, w1_t, b1_2d, w2_t, b2_2d)

    return out_flat.reshape(N, C, H, W)


def _reference(x, w1, b1, w2, b2):
    # Plain-JAX reference matching the PyTorch SqueezeExcitation forward.
    pooled = jnp.mean(x, axis=(2, 3))                          # (N, C)
    h = jnp.maximum(pooled @ w1.T + b1, 0.0)                   # (N, Cs)
    s = h @ w2.T + b2                                          # (N, C)
    s = jnp.clip(s / 6.0 + 0.5, 0.0, 1.0)                      # hardsigmoid
    return s[:, :, None, None] * x


if __name__ == "__main__":
    key = jax.random.PRNGKey(0)
    k_x, k_w1, k_b1, k_w2, k_b2 = jax.random.split(key, 5)

    N, C, H, W = 2, 4, 16, 16
    Cs = 2  # squeeze channels

    x = jax.random.normal(k_x, (N, C, H, W), dtype=jnp.float32)
    # Deterministic synthetic Conv2d(1x1) parameters (weight shape (out, in)).
    w1 = jax.random.normal(k_w1, (Cs, C), dtype=jnp.float32) * 0.5
    b1 = jax.random.normal(k_b1, (Cs,), dtype=jnp.float32) * 0.1
    w2 = jax.random.normal(k_w2, (C, Cs), dtype=jnp.float32) * 0.5
    b2 = jax.random.normal(k_b2, (C,), dtype=jnp.float32) * 0.1

    out = squeeze_excitation(x, w1, b1, w2, b2)
    out = jax.block_until_ready(out)

    ref = _reference(x, w1, b1, w2, b2)
    assert out.shape == (N, C, H, W)
    assert jnp.allclose(out, ref, atol=1e-5, rtol=1e-5)

    print("KERNEL_OK")
</pallas_src>

<mosaic_0001>
module attributes {stable_mosaic.version = 11 : i64} {
  func.func @_se_kernel(%arg0: i32, %arg1: memref<2x4x256xf32, #tpu.memory_space<vmem>>, %arg2: memref<4x2xf32, #tpu.memory_space<vmem>>, %arg3: memref<1x2xf32, #tpu.memory_space<vmem>>, %arg4: memref<2x4xf32, #tpu.memory_space<vmem>>, %arg5: memref<1x4xf32, #tpu.memory_space<vmem>>, %arg6: memref<2x4x256xf32, #tpu.memory_space<vmem>>) attributes {dimension_semantics = [#tpu.dimension_semantics<parallel>], iteration_bounds = array<i64: 1>, scalar_prefetch = 0 : i64, scratch_operands = 0 : i64, tpu.core_type = #tpu.core_type<tc>, window_params = [{transform_indices = @transform_0, window_bounds = array<i64: 2, 4, 256>}, {pipeline_mode = #tpu.pipeline_mode<synchronous>, transform_indices = @transform_1, window_bounds = array<i64: 4, 2>}, {pipeline_mode = #tpu.pipeline_mode<synchronous>, transform_indices = @transform_2, window_bounds = array<i64: 1, 2>}, {pipeline_mode = #tpu.pipeline_mode<synchronous>, transform_indices = @transform_3, window_bounds = array<i64: 2, 4>}, {pipeline_mode = #tpu.pipeline_mode<synchronous>, transform_indices = @transform_4, window_bounds = array<i64: 1, 4>}, {transform_indices = @transform_5, window_bounds = array<i64: 2, 4, 256>}]} {
    %c0 = arith.constant 0 : index
    %c0_0 = arith.constant 0 : index
    %c0_1 = arith.constant 0 : index
    %0 = vector.load %arg1[%c0, %c0_0, %c0_1] : memref<2x4x256xf32, #tpu.memory_space<vmem>>, vector<2x4x256xf32>
    %cst = arith.constant 1.000000e+00 : f32
    %1 = vector.broadcast %cst : f32 to vector<256x1xf32>
    %2 = vector.shape_cast %0 : vector<2x4x256xf32> to vector<8x256xf32>
    %cst_2 = arith.constant dense<0.000000e+00> : vector<8x1xf32>
    %3 = tpu.matmul %2, %1, %cst_2 {dimension_numbers = #tpu.dot_dimension_numbers<[1], [0], [0], [1], [0, 0, 1, 1], [], []>} : vector<8x256xf32>, vector<256x1xf32>, vector<8x1xf32> -> vector<8x1xf32>
    %4 = vector.shape_cast %3 : vector<8x1xf32> to vector<2x4xf32>
    %cst_3 = arith.constant 3.906250e-03 : f32
    %5 = vector.broadcast %cst_3 : f32 to vector<2x4xf32>
    %6 = arith.mulf %4, %5 : vector<2x4xf32>
    %c0_4 = arith.constant 0 : index
    %c0_5 = arith.constant 0 : index
    %7 = vector.load %arg2[%c0_4, %c0_5] : memref<4x2xf32, #tpu.memory_space<vmem>>, vector<4x2xf32>
    %cst_6 = arith.constant dense<0.000000e+00> : vector<2x2xf32>
    %8 = tpu.matmul %6, %7, %cst_6 {dimension_numbers = #tpu.dot_dimension_numbers<[1], [0], [0], [1], [0, 0, 1, 1], [], []>} : vector<2x4xf32>, vector<4x2xf32>, vector<2x2xf32> -> vector<2x2xf32>
    %c0_7 = arith.constant 0 : index
    %c0_8 = arith.constant 0 : index
    %9 = vector.load %arg3[%c0_7, %c0_8] : memref<1x2xf32, #tpu.memory_space<vmem>>, vector<1x2xf32>
    %10 = vector.broadcast %9 : vector<1x2xf32> to vector<2x2xf32>
    %11 = arith.addf %8, %10 : vector<2x2xf32>
    %cst_9 = arith.constant 0.000000e+00 : f32
    %12 = vector.broadcast %cst_9 : f32 to vector<2x2xf32>
    %13 = arith.maximumf %11, %12 : vector<2x2xf32>
    %c0_10 = arith.constant 0 : index
    %c0_11 = arith.constant 0 : index
    %14 = vector.load %arg4[%c0_10, %c0_11] : memref<2x4xf32, #tpu.memory_space<vmem>>, vector<2x4xf32>
    %cst_12 = arith.constant dense<0.000000e+00> : vector<2x4xf32>
    %15 = tpu.matmul %13, %14, %cst_12 {dimension_numbers = #tpu.dot_dimension_numbers<[1], [0], [0], [1], [0, 0, 1, 1], [], []>} : vector<2x2xf32>, vector<2x4xf32>, vector<2x4xf32> -> vector<2x4xf32>
    %c0_13 = arith.constant 0 : index
    %c0_14 = arith.constant 0 : index
    %16 = vector.load %arg5[%c0_13, %c0_14] : memref<1x4xf32, #tpu.memory_space<vmem>>, vector<1x4xf32>
    %17 = vector.broadcast %16 : vector<1x4xf32> to vector<2x4xf32>
    %18 = arith.addf %15, %17 : vector<2x4xf32>
    %cst_15 = arith.constant 0.166666672 : f32
    %19 = vector.broadcast %cst_15 : f32 to vector<2x4xf32>
    %20 = arith.mulf %18, %19 : vector<2x4xf32>
    %cst_16 = arith.constant 5.000000e-01 : f32
    %21 = vector.broadcast %cst_16 : f32 to vector<2x4xf32>
    %22 = arith.addf %20, %21 : vector<2x4xf32>
    %cst_17 = arith.constant 0.000000e+00 : f32
    %cst_18 = arith.constant 1.000000e+00 : f32
    %23 = vector.broadcast %cst_17 : f32 to vector<2x4xf32>
    %24 = arith.maximumf %23, %22 : vector<2x4xf32>
    %25 = vector.broadcast %cst_18 : f32 to vector<2x4xf32>
    %26 = arith.minimumf %25, %24 : vector<2x4xf32>
    %27 = vector.shape_cast %26 : vector<2x4xf32> to vector<2x4x1xf32>
    %28 = vector.broadcast %27 : vector<2x4x1xf32> to vector<2x4x256xf32>
    %29 = arith.mulf %0, %28 : vector<2x4x256xf32>
    %c0_19 = arith.constant 0 : index
    %c0_20 = arith.constant 0 : index
    %c0_21 = arith.constant 0 : index
    %30 = vector.load %arg6[%c0_19, %c0_20, %c0_21] : memref<2x4x256xf32, #tpu.memory_space<vmem>>, vector<2x4x256xf32>
    tpu.vector_store %arg6[%c0_19, %c0_20, %c0_21], %29 {strides = array<i32>} : memref<2x4x256xf32, #tpu.memory_space<vmem>>, vector<2x4x256xf32>,
    return
  }
  func.func @transform_0(%arg0: i32) -> (i32, i32, i32) {
    %c0_i32 = arith.constant 0 : i32
    %c0_i32_0 = arith.constant 0 : i32
    %c0_i32_1 = arith.constant 0 : i32
    return %arg0, %c0_i32, %c0_i32_0 : i32, i32, i32
  }
  func.func @transform_1(%arg0: i32) -> (i32, i32) {
    %c0_i32 = arith.constant 0 : i32
    %c0_i32_0 = arith.constant 0 : i32
    %c0_i32_1 = arith.constant 0 : i32
    return %c0_i32, %c0_i32_0 : i32, i32
  }
  func.func @transform_2(%arg0: i32) -> (i32, i32) {
    %c0_i32 = arith.constant 0 : i32
    %c0_i32_0 = arith.constant 0 : i32
    %c0_i32_1 = arith.constant 0 : i32
    return %c0_i32, %c0_i32_0 : i32, i32
  }
  func.func @transform_3(%arg0: i32) -> (i32, i32) {
    %c0_i32 = arith.constant 0 : i32
    %c0_i32_0 = arith.constant 0 : i32
    %c0_i32_1 = arith.constant 0 : i32
    return %c0_i32, %c0_i32_0 : i32, i32
  }
  func.func @transform_4(%arg0: i32) -> (i32, i32) {
    %c0_i32 = arith.constant 0 : i32
    %c0_i32_0 = arith.constant 0 : i32
    %c0_i32_1 = arith.constant 0 : i32
    return %c0_i32, %c0_i32_0 : i32, i32
  }
  func.func @transform_5(%arg0: i32) -> (i32, i32, i32) {
    %c0_i32 = arith.constant 0 : i32
    %c0_i32_0 = arith.constant 0 : i32
    %c0_i32_1 = arith.constant 0 : i32
    return %arg0, %c0_i32, %c0_i32_0 : i32, i32, i32
  }
}

</mosaic_0001>

<llo_original>
// kernel: tpu_custom_call.1
$region0: #{tpu_custom_call.1}
  #allocation0 [shape = 'u32[]', space=smem, size = 0x4, offset = 0x4, fixed_abs, tag = 'smem constant byte address 0x4 - core index']
  #allocation1 [shape = 'u32[144,128]{1,0:T(1,128)}', space=vmem, size = 0x12000, scoped, tag = 'internal scratch']
  %s0 = inlined_call_operand.hbm [shape: f32[2,4,256], index: 0, kind: input, shape index: {}]
  %s1 = inlined_call_operand.vmem [shape: f32[4,2], index: 1, kind: input, shape index: {}]
  %s2 = inlined_call_operand.vmem [shape: f32[1,2], index: 2, kind: input, shape index: {}]
  %s3 = inlined_call_operand.vmem [shape: f32[2,4], index: 3, kind: input, shape index: {}]
  %s4 = inlined_call_operand.vmem [shape: f32[1,4], index: 4, kind: input, shape index: {}]
  %s5 = inlined_call_operand.hbm [shape: f32[2,4,256], index: 5, kind: output, shape index: {}]
  %s6 = sld [smem:[#allocation0]]
  $region34: #{tpu_custom_call.1} parent=0
    _
  %s8 = ssub.s32 1, %s6
  %s9 = scalar_select 0, %s8, %s6
  $region1: #{tpu_custom_call.1} parent=0
    #allocation2 [shape = 'u8[8192]{0}', space=vmem, size = 0x2000, scoped, tag = 'input window, operand 0, single buffered']
    #allocation3 [shape = 's32[1]{0}', space=sflag, size = 0x4, scoped, tag = 'scoped memory for tpu_custom_call.1']
    #allocation4 [shape = 's32[1]{0}', space=sflag, size = 0x4, scoped, tag = 'scoped memory for tpu_custom_call.1']
    #allocation5 [shape = 'u8[8192]{0}', space=vmem, size = 0x2000, scoped, tag = 'output window, operand 0, single buffered']
    %10 = vsyncpa [#allocation3], 0
    %11 = vsyncpa [#allocation4], 0
    // Predicated region
    $region2: #{tpu_custom_call.1} parent=1 // pred_check
      _
    $region3: #{tpu_custom_call.1} parent=1 // pred_check_branch
      %13 = sbr.rel (0) target = $region5
    $region4: #{tpu_custom_call.1} parent=1 // pred_region
      %s15 = ssub.s32 256, 256
      %16 = vsyncadd [#allocation3], %s15
      %s17 = sshll.u32 [#allocation2], 4
      %s18 = int_to_ptr.vmem [resolvable:$true] %s17
      %23 = dma.hbm_to_vmem [thread:$0]  %s0, 256, %s18, [#allocation3], 128, 128, 8
    $region5: #{tpu_custom_call.1} parent=1 // pred_fallthru
      _
    // Predicated region
    $region6: #{tpu_custom_call.1} parent=1 // pred_check
      _
    $region7: #{tpu_custom_call.1} parent=1 // pred_check_branch
      %25 = sbr.rel (0) target = $region9
    $region8: #{tpu_custom_call.1} parent=1 // pred_region
      _
    $region9: #{tpu_custom_call.1} parent=1 // pred_fallthru
      _
    // Predicated region
    $region10: #{tpu_custom_call.1} parent=1 // pred_check
      _
    $region11: #{tpu_custom_call.1} parent=1 // pred_check_branch
      %27 = sbr.rel (0) target = $region13
    $region12: #{tpu_custom_call.1} parent=1 // pred_region
      _
    $region13: #{tpu_custom_call.1} parent=1 // pred_fallthru
      _
    // Predicated region
    $region14: #{tpu_custom_call.1} parent=1 // pred_check
      _
    $region15: #{tpu_custom_call.1} parent=1 // pred_check_branch
      %29 = sbr.rel (0) target = $region17
    $region16: #{tpu_custom_call.1} parent=1 // pred_region
      _
    $region17: #{tpu_custom_call.1} parent=1 // pred_fallthru
      _
    // Predicated region
    $region18: #{tpu_custom_call.1} parent=1 // pred_check
      _
    $region19: #{tpu_custom_call.1} parent=1 // pred_check_branch
      %31 = sbr.rel (0) target = $region21
    $region20: #{tpu_custom_call.1} parent=1 // pred_region
      _
    $region21: #{tpu_custom_call.1} parent=1 // pred_fallthru
      _
    // Predicated region
    $region22: #{tpu_custom_call.1} parent=1 // pred_check
      _
    $region23: #{tpu_custom_call.1} parent=1 // pred_check_branch
      %33 = sbr.rel (0) target = $region25
    $region24: #{tpu_custom_call.1} parent=1 // pred_region
      %34 = dma.done [#allocation3], 256
    $region25: #{tpu_custom_call.1} parent=1 // pred_fallthru
      _
    %v35 = vld [vmem:[#allocation2] sm:$0xff]
    %v36 = vld [vmem:[#allocation2 + $0x8] sm:$0xff]
    %v39 = vcombine.low %v35, %v36
    %v40 = vcombine.high %v35, %v36
    %43 = vmatprep.subr.mxu0 0.0
    %44 = vmatpush1.msra.mxu0 1.0
    %45 = vmatprep.subr.mxu0 0.0
    %46 = vmatpush1.msra.mxu0 1.0
    %47 = vmatprep.subr.mxu0 0.0
    %48 = vmatpush1.msra.mxu0 1.0
    %49 = vmatprep.subr.mxu0 0.0
    %50 = vmatpush1.msra.mxu0 1.0
    %51 = vmatprep.subr.mxu0 0.0
    %52 = vmatpush1.msra.mxu0 1.0
    %53 = vmatprep.subr.mxu0 0.0
    %54 = vmatpush1.msra.mxu0 1.0
    %55 = vmatprep.subr.mxu0 0.0
    %56 = vmatpush1.msra.mxu0 1.0
    %57 = vmatprep.subr.mxu0 0.0
    %58 = vmatpush1.msra.mxu0 1.0
    %59 = vmatprep.subr.mxu0 0.0
    %60 = vmatpush1.msra.mxu0 1.0
    %61 = vmatprep.subr.mxu0 0.0
    %62 = vmatpush1.msra.mxu0 1.0
    %63 = vmatprep.subr.mxu0 0.0
    %64 = vmatpush1.msra.mxu0 1.0
    %65 = vmatprep.subr.mxu0 0.0
    %66 = vmatpush1.msra.mxu0 1.0
    %67 = vmatprep.subr.mxu0 0.0
    %68 = vmatpush1.msra.mxu0 1.0
    %69 = vmatprep.subr.mxu0 0.0
    %70 = vmatpush1.msra.mxu0 1.0
    %71 = vmatprep.subr.mxu0 0.0
    %72 = vmatpush1.msra.mxu0 1.0
    %73 = vmatprep.subr.mxu0 0.0
    %74 = vmatpush1.msra.mxu0 1.0
    %75 = vmatprep.subr.mxu0 0.0
    %76 = vmatpush2.msra.mxu0 1.0
    %77 = vmatprep.subr.mxu0 0.0
    %78 = vmatpush2.msra.mxu0 1.0
    %79 = vmatprep.subr.mxu0 0.0
    %80 = vmatpush2.msra.mxu0 1.0
    %81 = vmatprep.subr.mxu0 0.0
    %82 = vmatpush2.msra.mxu0 1.0
    %83 = vmatprep.subr.mxu0 0.0
    %84 = vmatpush2.msra.mxu0 1.0
    %85 = vmatprep.subr.mxu0 0.0
    %86 = vmatpush2.msra.mxu0 1.0
    %87 = vmatprep.subr.mxu0 0.0
    %88 = vmatpush2.msra.mxu0 1.0
    %89 = vmatprep.subr.mxu0 0.0
    %90 = vmatpush2.msra.mxu0 1.0
    %91 = vmatprep.subr.mxu0 0.0
    %92 = vmatpush2.msra.mxu0 1.0
    %93 = vmatprep.subr.mxu0 0.0
    %94 = vmatpush2.msra.mxu0 1.0
    %95 = vmatprep.subr.mxu0 0.0
    %96 = vmatpush2.msra.mxu0 1.0
    %97 = vmatprep.subr.mxu0 0.0
    %98 = vmatpush2.msra.mxu0 1.0
    %99 = vmatprep.subr.mxu0 0.0
    %100 = vmatpush2.msra.mxu0 1.0
    %101 = vmatprep.subr.mxu0 0.0
    %102 = vmatpush2.msra.mxu0 1.0
    %103 = vmatprep.subr.mxu0 0.0
    %104 = vmatpush2.msra.mxu0 1.0
    %105 = vmatprep.subr.mxu0 0.0
    %106 = vmatpush2.msra.mxu0 1.0
    %107 = vmatprep.mubr.f32.mxu0 %v40
    %108 = vmatmul.mubr.f32.gmra.mxu0 %v39
    %v109 = vpop.f32.mrf.mxu0
    %v110 = vadd.f32 0.0, %v109
    %v111 = vpop.f32.mrf.mxu0
    %112 = vdwg.mxu0
    %v114 = vcombine.high %v110, %v110
    %v116 = vmul.f32 %v110, 0.00390625
    %v117 = vmul.f32 %v114, 0.00390625
    %v118 = vld [vmem:[%s1] sm:$0xf]
    %v119 = vld [vmem:[%s2] sm:$0x1]
    %v121 = vlaneseq
    %v122 = vshrl.u32 %v121, 7
    %v123 = vsub.s32 0, %v122
    %v124 = vrot.slane %v119, %v123
    %128 = vset.pattern.permute.xlu0 0
    %129 = vperm.xlu0 %128, %v116
    %v130 = vpop.permute.xlu0 %129
    %131 = vset.pattern.permute.xlu0 0
    %132 = vperm.xlu0 %131, %v117
    %v133 = vpop.permute.xlu0 %132
    %v134 = vlaneseq
    %v135 = vand.u32 %v134, 127
    %v136 = vlaneseq
    %v137 = vshrl.u32 %v136, 7
    %v138 = vsub.s32 %v135, %v137
    %v139 = vrot.slane %v130, %v138
    %v140 = vlaneseq
    %v141 = vshrl.u32 %v140, 7
    %v142 = vsub.s32 %v135, %v141
    %v143 = vrot.slane %v133, %v142
    %vm144 = vcmask 1041409
    %v145 = vsel %vm144, %v143, %v139
    %vm146 = vcmask 31744
    %v147 = vsel %vm146, %v145, 0
    %vm149 = vcmask 1043456
    %v151 = vsel %vm149, %v118, 0
    %153 = vmatprep.subr.mxu0 0.0
    %154 = vmatpush1.msra.mxu0 0.0
    %155 = vmatprep.subr.mxu0 0.0
    %156 = vmatpush1.msra.mxu0 0.0
    %157 = vmatprep.subr.mxu0 0.0
    %158 = vmatpush1.msra.mxu0 0.0
    %159 = vmatprep.subr.mxu0 0.0
    %160 = vmatpush1.msra.mxu0 0.0
    %161 = vmatprep.subr.mxu0 0.0
    %162 = vmatpush1.msra.mxu0 0.0
    %163 = vmatprep.subr.mxu0 0.0
    %164 = vmatpush1.msra.mxu0 0.0
    %165 = vmatprep.subr.mxu0 0.0
    %166 = vmatpush1.msra.mxu0 0.0
    %167 = vmatprep.subr.mxu0 0.0
    %168 = vmatpush1.msra.mxu0 0.0
    %169 = vmatprep.subr.mxu0 0.0
    %170 = vmatpush1.msra.mxu0 0.0
    %171 = vmatprep.subr.mxu0 0.0
    %172 = vmatpush1.msra.mxu0 0.0
    %173 = vmatprep.subr.mxu0 0.0
    %174 = vmatpush1.msra.mxu0 0.0
    %175 = vmatprep.subr.mxu0 0.0
    %176 = vmatpush1.msra.mxu0 0.0
    %177 = vmatprep.subr.mxu0 0.0
    %178 = vmatpush1.msra.mxu0 0.0
    %179 = vmatprep.subr.mxu0 0.0
    %180 = vmatpush1.msra.mxu0 0.0
    %181 = vmatprep.subr.mxu0 0.0
    %182 = vmatpush1.msra.mxu0 0.0
    %183 = vmatprep.subr.mxu0 0.0
    %184 = vmatpush1.msra.mxu0 %v151
    %185 = vmatprep.subr.mxu0 0.0
    %186 = vmatpush2.msra.mxu0 0.0
    %187 = vmatprep.subr.mxu0 0.0
    %188 = vmatpush2.msra.mxu0 0.0
    %189 = vmatprep.subr.mxu0 0.0
    %190 = vmatpush2.msra.mxu0 0.0
    %191 = vmatprep.subr.mxu0 0.0
    %192 = vmatpush2.msra.mxu0 0.0
    %193 = vmatprep.subr.mxu0 0.0
    %194 = vmatpush2.msra.mxu0 0.0
    %195 = vmatprep.subr.mxu0 0.0
    %196 = vmatpush2.msra.mxu0 0.0
    %197 = vmatprep.subr.mxu0 0.0
    %198 = vmatpush2.msra.mxu0 0.0
    %199 = vmatprep.subr.mxu0 0.0
    %200 = vmatpush2.msra.mxu0 0.0
    %201 = vmatprep.subr.mxu0 0.0
    %202 = vmatpush2.msra.mxu0 0.0
    %203 = vmatprep.subr.mxu0 0.0
    %204 = vmatpush2.msra.mxu0 0.0
    %205 = vmatprep.subr.mxu0 0.0
    %206 = vmatpush2.msra.mxu0 0.0
    %207 = vmatprep.subr.mxu0 0.0
    %208 = vmatpush2.msra.mxu0 0.0
    %209 = vmatprep.subr.mxu0 0.0
    %210 = vmatpush2.msra.mxu0 0.0
    %211 = vmatprep.subr.mxu0 0.0
    %212 = vmatpush2.msra.mxu0 0.0
    %213 = vmatprep.subr.mxu0 0.0
    %214 = vmatpush2.msra.mxu0 0.0
    %215 = vmatprep.subr.mxu0 0.0
    %216 = vmatpush2.msra.mxu0 0.0
    %217 = vmatprep.mubr.f32.mxu0 0.0
    %218 = vmatmul.mubr.f32.gmra.mxu0 %v147
    %v219 = vpop.f32.mrf.mxu0
    %v220 = vadd.f32 %v124, %v219
    %v221 = vpop.f32.mrf.mxu0
    %222 = vdwg.mxu0
    %v223 = vmax.f32 %v220, 0.0
    %v224 = vld [vmem:[%s3] sm:$0x3]
    %v225 = vld [vmem:[%s4] sm:$0x1]
    %v227 = vlaneseq
    %v228 = vshrl.u32 %v227, 7
    %v229 = vsub.s32 0, %v228
    %v230 = vrot.slane %v225, %v229
    %vm232 = vcmask 15360
    %v234 = vsel %vm232, %v223, 0
    %vm236 = vcmask 1041408
    %v238 = vsel %vm236, %v224, 0
    %240 = vmatprep.subr.mxu0 0.0
    %241 = vmatpush1.msra.mxu0 0.0
    %242 = vmatprep.subr.mxu0 0.0
    %243 = vmatpush1.msra.mxu0 0.0
    %244 = vmatprep.subr.mxu0 0.0
    %245 = vmatpush1.msra.mxu0 0.0
    %246 = vmatprep.subr.mxu0 0.0
    %247 = vmatpush1.msra.mxu0 0.0
    %248 = vmatprep.subr.mxu0 0.0
    %249 = vmatpush1.msra.mxu0 0.0
    %250 = vmatprep.subr.mxu0 0.0
    %251 = vmatpush1.msra.mxu0 0.0
    %252 = vmatprep.subr.mxu0 0.0
    %253 = vmatpush1.msra.mxu0 0.0
    %254 = vmatprep.subr.mxu0 0.0
    %255 = vmatpush1.msra.mxu0 0.0
    %256 = vmatprep.subr.mxu0 0.0
    %257 = vmatpush1.msra.mxu0 0.0
    %258 = vmatprep.subr.mxu0 0.0
    %259 = vmatpush1.msra.mxu0 0.0
    %260 = vmatprep.subr.mxu0 0.0
    %261 = vmatpush1.msra.mxu0 0.0
    %262 = vmatprep.subr.mxu0 0.0
    %263 = vmatpush1.msra.mxu0 0.0
    %264 = vmatprep.subr.mxu0 0.0
    %265 = vmatpush1.msra.mxu0 0.0
    %266 = vmatprep.subr.mxu0 0.0
    %267 = vmatpush1.msra.mxu0 0.0
    %268 = vmatprep.subr.mxu0 0.0
    %269 = vmatpush1.msra.mxu0 0.0
    %270 = vmatprep.subr.mxu0 0.0
    %271 = vmatpush1.msra.mxu0 %v238
    %272 = vmatprep.subr.mxu0 0.0
    %273 = vmatpush2.msra.mxu0 0.0
    %274 = vmatprep.subr.mxu0 0.0
    %275 = vmatpush2.msra.mxu0 0.0
    %276 = vmatprep.subr.mxu0 0.0
    %277 = vmatpush2.msra.mxu0 0.0
    %278 = vmatprep.subr.mxu0 0.0
    %279 = vmatpush2.msra.mxu0 0.0
    %280 = vmatprep.subr.mxu0 0.0
    %281 = vmatpush2.msra.mxu0 0.0
    %282 = vmatprep.subr.mxu0 0.0
    %283 = vmatpush2.msra.mxu0 0.0
    %284 = vmatprep.subr.mxu0 0.0
    %285 = vmatpush2.msra.mxu0 0.0
    %286 = vmatprep.subr.mxu0 0.0
    %287 = vmatpush2.msra.mxu0 0.0
    %288 = vmatprep.subr.mxu0 0.0
    %289 = vmatpush2.msra.mxu0 0.0
    %290 = vmatprep.subr.mxu0 0.0
    %291 = vmatpush2.msra.mxu0 0.0
    %292 = vmatprep.subr.mxu0 0.0
    %293 = vmatpush2.msra.mxu0 0.0
    %294 = vmatprep.subr.mxu0 0.0
    %295 = vmatpush2.msra.mxu0 0.0
    %296 = vmatprep.subr.mxu0 0.0
    %297 = vmatpush2.msra.mxu0 0.0
    %298 = vmatprep.subr.mxu0 0.0
    %299 = vmatpush2.msra.mxu0 0.0
    %300 = vmatprep.subr.mxu0 0.0
    %301 = vmatpush2.msra.mxu0 0.0
    %302 = vmatprep.subr.mxu0 0.0
    %303 = vmatpush2.msra.mxu0 0.0
    %304 = vmatprep.mubr.f32.mxu0 0.0
    %305 = vmatmul.mubr.f32.gmra.mxu0 %v234
    %v306 = vpop.f32.mrf.mxu0
    %v307 = vadd.f32 %v230, %v306
    %v308 = vpop.f32.mrf.mxu0
    %309 = vdwg.mxu0
    %v310 = vmul.f32 %v307, 0.16666667
    %v311 = vadd.f32 %v310, 0.5
    %v312 = vmax.f32 %v311, 0.0
    %v313 = vmin.f32 %v312, 1.0
    %v314 = vlaneseq
    %v315 = vshrl.u32 %v314, 7
    %v316 = vsub.s32 0, %v315
    %v317 = vrot.slane %v313, %v316
    %319 = vbcast.lane.b32.xlu0 %v317, 256
    %v320 = vpop.permute.xlu0 %319
    %v321 = vlaneseq
    %v322 = vshrl.u32 %v321, 7
    %v323 = vsub.s32 1, %v322
    %v324 = vrot.slane %v313, %v323
    %326 = vbcast.lane.b32.xlu0 %v324, 256
    %v327 = vpop.permute.xlu0 %326
    %v331 = vunpack.c.l.s4 839922192
    %v332 = vunpack.c.0.s8 %v331
    %v333 = vlaneseq
    %v334 = vshrl.u32 %v333, 7
    %v335 = vsub.s32 %v332, %v334
    %v336 = vrot.slane %v320, %v335
    %v338 = vunpack.c.l.s4 839922192
    %v339 = vunpack.c.0.s8 %v338
    %v340 = vlaneseq
    %v341 = vshrl.u32 %v340, 7
    %v342 = vsub.s32 %v339, %v341
    %v343 = vrot.slane %v327, %v342
    %v346 = vmul.f32 %v35, %v336
    %v347 = vmul.f32 %v36, %v343
    %348 = vst [vmem:[#allocation5] sm:$0xff] %v346
    %349 = vst [vmem:[#allocation5 + $0x8] sm:$0xff] %v347
    // Predicated region
    $region26: #{tpu_custom_call.1} parent=1 // pred_check
      _
    $region27: #{tpu_custom_call.1} parent=1 // pred_check_branch
      %351 = sbr.rel (0) target = $region29
    $region28: #{tpu_custom_call.1} parent=1 // pred_region
      %s353 = ssub.s32 256, 256
      %354 = vsyncadd [#allocation4], %s353
      %s355 = sshll.u32 [#allocation5], 4
      %s356 = int_to_ptr.vmem [resolvable:$true] %s355
      %361 = dma.vmem_to_hbm [thread:$0]  %s356, 256, %s5, [#allocation4], 128, 128, 8
    $region29: #{tpu_custom_call.1} parent=1 // pred_fallthru
      _
    // Predicated region
    $region30: #{tpu_custom_call.1} parent=1 // pred_check
      _
    $region31: #{tpu_custom_call.1} parent=1 // pred_check_branch
      %363 = sbr.rel (0) target = $region33
    $region32: #{tpu_custom_call.1} parent=1 // pred_region
      %364 = dma.done [#allocation4], 256
    $region33: #{tpu_custom_call.1} parent=1 // pred_fallthru
      _
    %365 = vsyncpa [#allocation3], 1
    %366 = vsyncpa [#allocation4], 1

</llo_original>
